<compile_context>
chip_gen: v6e
topology: v6e:2x2x1
jax: 0.10.0
libtpu: 0.0.40
codegen_flags: <defaults>
</compile_context>

<pallas_src>
import numpy as np
import jax
import jax.numpy as jnp
from jax.experimental import pallas as pl
from jax.experimental.pallas import tpu as pltpu

# ---- deterministic model parameters (WaterModel.__init__ buffers) ----
CUTOFF = 5.0
LJ_SIGMA = 3.1589
LJ_EPSILON = 0.1852
M_GAMMA = 0.73612
M_CHARGE = 1.1128
OH_BOND_EQ = 0.9419
OH_BOND_K = 1164.964
OH_BOND_ALPHA = 2.287
HOH_ANGLE_EQ = 1.87448             # rad
HOH_ANGLE_K = 87.85
PREFACTOR_KCALMOL_A = 332.0637133  # torchpme.prefactors.kcalmol_A

LANES = 128

# Once-resident O(N) categories (5 rows); pads are energy-neutral.
IDX_OO, IDX_OH, IDX_ANG, IDX_MH, IDX_HH = range(5)
N_SMALL = 5
# NOTE: the MH/HH pad must be large-but-FINITE: recip(1e30) ~ 1e-30 is a
# normal f32 and the Newton step stays finite; an inf pad would give inf*0=NaN.
SMALL_PADS = (CUTOFF, OH_BOND_EQ, HOH_ANGLE_EQ, 1e30, 1e30)

# Streamed O(N^2) Coulomb categories (2 rows): q_i*q_j (pad 0) and dist (pad 1).
N_COUL = 2

N_OUT = 6  # [e_lj, e_bond, e_bend, e_coul, e_self, e_total]


# ----------------------------- Pallas kernel --------------------------------
def _water_energy_kernel(small_ref, coul_ref, out_ref, acc_ref):
    c = pl.program_id(0)

    def recip(x):
        # EUP approximate reciprocal + one Newton step -> ~f32-exact, keeps
        # the VALU slots free (this stays filler under the HBM roofline).
        r = pl.reciprocal(x, approx=True)
        return r * (2.0 - x * r)

    @pl.when(c == 0)
    def _():
        acc_ref[...] = jnp.zeros_like(acc_ref)

    # --- streamed direct Coulomb: per-element VPU accumulation only --------
    qq = coul_ref[0, 0]          # (S, 128)  q_i*q_j, pad 0.0
    pd = coul_ref[0, 1]          # (S, 128)  M-site pair distance, pad 1.0
    acc_ref[...] += qq * recip(pd)

    @pl.when(c == pl.num_programs(0) - 1)
    def _():
        # --- O(N) categories: once-resident block, processed exactly once --
        oo_d = small_ref[IDX_OO]
        oh_d = small_ref[IDX_OH]
        ang = small_ref[IDX_ANG]
        mh_d = small_ref[IDX_MH]
        hh_d = small_ref[IDX_HH]

        # shifted Lennard-Jones on O-O pairs (pad = CUTOFF -> term == 0)
        s = LJ_SIGMA * recip(oo_d)
        s2 = s * s
        c6 = s2 * s2 * s2
        sc6 = (LJ_SIGMA / CUTOFF) ** 6
        offset = 4.0 * LJ_EPSILON * sc6 * (sc6 - 1.0)
        e_lj = jnp.sum(4.0 * LJ_EPSILON * (c6 * c6 - c6) - offset)

        # anharmonic OH bond energy (pad = OH_BOND_EQ -> term == 0)
        dr = oh_d - OH_BOND_EQ
        adr = dr * OH_BOND_ALPHA
        e_bond = jnp.sum(0.5 * OH_BOND_K * dr * dr *
                         (1.0 - adr + adr * adr * (7.0 / 12.0)))

        # harmonic HOH bend energy (pad = HOH_ANGLE_EQ -> term == 0)
        da = ang - HOH_ANGLE_EQ
        e_bend = jnp.sum(0.5 * HOH_ANGLE_K * da * da)

        # intra-molecular self-interaction correction (pad = 1e30 -> ~0)
        s_mh = jnp.sum(recip(mh_d))
        s_hh = jnp.sum(recip(hh_d))
        e_self = (s_mh * (-M_CHARGE) + s_hh * (0.5 * M_CHARGE)) * \
                 (0.5 * M_CHARGE * PREFACTOR_KCALMOL_A)

        # single XLU cross-lane reduction of the streamed Coulomb accumulator
        e_coul = PREFACTOR_KCALMOL_A * jnp.sum(acc_ref[...])

        out_ref[0] = e_lj
        out_ref[1] = e_bond
        out_ref[2] = e_bend
        out_ref[3] = e_coul
        out_ref[4] = e_self
        out_ref[5] = e_bond + e_bend + e_lj + e_coul - e_self


@jax.jit
def water_energy_terms(small, coul):
    """small: (5, S_small, 128) resident terms; coul: (num_chunks, 2, S, 128)."""
    num_chunks, _, chunk_sublanes, _ = coul.shape
    _, small_sublanes, _ = small.shape
    return pl.pallas_call(
        _water_energy_kernel,
        out_shape=jax.ShapeDtypeStruct((N_OUT,), jnp.float32),
        grid_spec=pltpu.PrefetchScalarGridSpec(
            num_scalar_prefetch=0,
            grid=(num_chunks,),
            in_specs=[
                # O(N) categories: constant index_map -> DMA'd once, resident.
                pl.BlockSpec((N_SMALL, small_sublanes, LANES),
                             lambda c: (0, 0, 0)),
                # O(N^2) Coulomb terms: one contiguous block per grid step.
                pl.BlockSpec((1, N_COUL, chunk_sublanes, LANES),
                             lambda c: (c, 0, 0, 0)),
            ],
            out_specs=pl.BlockSpec((N_OUT,), lambda c: (0,),
                                   memory_space=pltpu.MemorySpace.SMEM),
            scratch_shapes=[pltpu.VMEM((chunk_sublanes, LANES), jnp.float32)],
        ),
        compiler_params=pltpu.CompilerParams(
            dimension_semantics=("arbitrary",)),
    )(small, coul)


# ------------------------------- packing ------------------------------------
def choose_chunk_sublanes(n_terms, target_chunks=8, min_sublanes=8,
                          max_sublanes=1024):
    """Pick the streamed-chunk height (sublane count), per perf guidance.

    Big chunks amortize the ~0.35 us/step grid overhead and make each DMA one
    contiguous transfer, but we keep at least `target_chunks` grid steps so
    the double-buffered pipeline reaches steady state, and cap the block at
    2*1024*128*4 B = 1 MiB so the double-buffered footprint (~2 MiB + the tiny
    resident block + <=0.5 MiB accumulator) stays far below the scoped-VMEM
    default on every generation (v5e 16 MiB, v6e/v7x 32 MiB; v7x 64 MiB phys).
    """
    per_chunk = -(-max(int(n_terms), 1) // (target_chunks * LANES))
    sublanes = -(-per_chunk // 8) * 8
    return int(min(max(sublanes, min_sublanes), max_sublanes))


def pack_small_terms(oo_dist, oh_dist, hoh_angles, mh_dist, hh_dist):
    """Pack the five O(N) categories into one (5, S_small, 128) resident block
    with energy-neutral pad values (no masks needed)."""
    cats = [np.asarray(c, np.float32).reshape(-1)
            for c in (oo_dist, oh_dist, hoh_angles, mh_dist, hh_dist)]
    max_len = max(max(c.shape[0] for c in cats), 1)
    sublanes = -(-(-(-max_len // LANES)) // 8) * 8  # ceil(len/128) -> mult of 8
    total = sublanes * LANES
    packed = np.empty((N_SMALL, total), np.float32)
    for i, (c, pv) in enumerate(zip(cats, SMALL_PADS)):
        packed[i, :] = np.float32(pv)
        packed[i, :c.shape[0]] = c
    return jnp.asarray(packed.reshape(N_SMALL, sublanes, LANES))


def pack_coulomb_terms(qq, m_d, chunk_sublanes):
    """Pack the O(N^2) Coulomb terms as (num_chunks, 2, S, 128) so each grid
    step is a single contiguous DMA.  qq pads with 0 (term == 0), distance
    pads with 1 (finite, reciprocal-safe)."""
    qq = np.asarray(qq, np.float32).reshape(-1)
    m_d = np.asarray(m_d, np.float32).reshape(-1)
    n = qq.shape[0]
    chunk_elems = chunk_sublanes * LANES
    num_chunks = max(1, -(-n // chunk_elems))
    total = num_chunks * chunk_elems
    qq_p = np.zeros(total, np.float32)
    qq_p[:n] = qq
    md_p = np.ones(total, np.float32)
    md_p[:n] = m_d
    packed = np.stack([qq_p, md_p], axis=0)
    packed = packed.reshape(N_COUL, num_chunks, chunk_sublanes, LANES)
    packed = np.ascontiguousarray(packed.transpose(1, 0, 2, 3))
    return jnp.asarray(packed), num_chunks


# ------------------------------- host prep ----------------------------------
def build_water_system(n_mol, key):
    """Synthetic water box: n_mol molecules in OHH order on a grid + noise."""
    r_oh = 0.9572
    theta = np.deg2rad(104.52)
    mol = np.array([[0.0, 0.0, 0.0],
                    [r_oh, 0.0, 0.0],
                    [r_oh * np.cos(theta), r_oh * np.sin(theta), 0.0]])
    spacing = 3.2
    n_side = int(np.ceil(n_mol ** (1.0 / 3.0)))
    centers = []
    for i in range(n_side):
        for j in range(n_side):
            for k in range(n_side):
                if len(centers) < n_mol:
                    centers.append([i * spacing, j * spacing, k * spacing])
    centers = np.asarray(centers, np.float64)
    pos = (centers[:, None, :] + mol[None, :, :]).reshape(-1, 3)
    noise = 0.02 * jax.random.normal(key, pos.shape, dtype=jnp.float32)
    positions = jnp.asarray(pos, jnp.float32) + noise
    types = jnp.asarray(np.tile(np.array([8, 1, 1]), n_mol), jnp.int32)
    return positions, types


def prepare_inputs(positions, types, n_mol):
    """Host-side geometry / neighbor-list bookkeeping (get_molecular_geometry)."""
    pos = np.asarray(positions, np.float64)
    typ = np.asarray(types)
    n = pos.shape[0]

    # half neighbor list, no PBC.
    ii, jj = np.triu_indices(n, k=1)
    rij = pos[jj] - pos[ii]
    dij = np.linalg.norm(rij, axis=1)
    keep = dij < CUTOFF
    ii, jj, dij = ii[keep], jj[keep], dij[keep]

    # O-O pair distances for Lennard-Jones
    oo = (typ[ii] == 8) & (typ[jj] == 8)
    oo_dist = dij[oo]

    # molecular geometry (atoms listed in OHH order by construction)
    o_idx = np.arange(n_mol) * 3
    doh_1 = pos[o_idx + 1] - pos[o_idx]
    doh_2 = pos[o_idx + 2] - pos[o_idx]
    d1 = np.linalg.norm(doh_1, axis=1)
    d2 = np.linalg.norm(doh_2, axis=1)
    oh_dist = np.concatenate([d1, d2])
    hoh_angles = np.arccos(np.sum(doh_1 * doh_2, axis=1) / (d1 * d2))

    # M-site positions and charges
    om_disp = (1.0 - M_GAMMA) * 0.5 * (doh_1 + doh_2)
    om_full = np.zeros_like(pos)
    om_full[o_idx] = om_disp
    m_pos = pos + om_full
    charges = np.where(typ == 8, -M_CHARGE, 0.5 * M_CHARGE)

    # all pairs on M-site geometry for the direct Coulomb sum
    ci, cj = np.triu_indices(n, k=1)
    m_d = np.linalg.norm(m_pos[cj] - m_pos[ci], axis=1)
    qq = charges[ci] * charges[cj]

    # intra-molecular self-term distances
    dmh_1 = doh_1 - om_disp
    dmh_2 = doh_2 - om_disp
    mh_dist = np.concatenate([np.linalg.norm(dmh_1, axis=1),
                              np.linalg.norm(dmh_2, axis=1)])
    hh_dist = np.linalg.norm(doh_1 - doh_2, axis=1)

    return oo_dist, oh_dist, hoh_angles, mh_dist, hh_dist, qq, m_d


def reference_energy(oo_dist, oh_dist, ang, mh_dist, hh_dist, qq, m_d):
    """Pure-numpy (float64) reference of the same energy terms."""
    c6 = (LJ_SIGMA / oo_dist) ** 6
    sc6 = (LJ_SIGMA / CUTOFF) ** 6
    offset = 4.0 * LJ_EPSILON * sc6 * (sc6 - 1.0)
    e_lj = np.sum(4.0 * LJ_EPSILON * (c6 ** 2 - c6) - offset)

    dr = oh_dist - OH_BOND_EQ
    adr = dr * OH_BOND_ALPHA
    e_bond = np.sum(0.5 * OH_BOND_K * dr ** 2 *
                    (1.0 - adr + adr ** 2 * 7.0 / 12.0))

    e_bend = np.sum(0.5 * HOH_ANGLE_K * (ang - HOH_ANGLE_EQ) ** 2)

    e_coul = PREFACTOR_KCALMOL_A * np.sum(qq / m_d)

    e_self = (np.sum(1.0 / mh_dist) * (-M_CHARGE) +
              np.sum(1.0 / hh_dist) * 0.5 * M_CHARGE) * \
             0.5 * M_CHARGE * PREFACTOR_KCALMOL_A

    e_tot = e_bond + e_bend + e_lj + e_coul - e_self
    return np.array([e_lj, e_bond, e_bend, e_coul, e_self, e_tot])


if __name__ == "__main__":
    key = jax.random.PRNGKey(0)
    n_mol = 32  # matches the water_32 system of the reference script (96 atoms)
    positions, types = build_water_system(n_mol, key)

    geo = prepare_inputs(positions, types, n_mol)
    oo_dist, oh_dist, hoh_angles, mh_dist, hh_dist, qq, m_d = geo

    small = pack_small_terms(oo_dist, oh_dist, hoh_angles, mh_dist, hh_dist)
    chunk_sublanes = choose_chunk_sublanes(qq.shape[0])  # hits 512-1024 for big systems
    coul, num_chunks = pack_coulomb_terms(qq, m_d, chunk_sublanes)

    terms = jax.block_until_ready(water_energy_terms(small, coul))

    ref = reference_energy(*geo)
    np.testing.assert_allclose(np.asarray(terms), ref, rtol=1e-3, atol=0.5)

    print("KERNEL_OK")
</pallas_src>

<mosaic_0001>
module attributes {stable_mosaic.version = 11 : i64} {
  func.func @_water_energy_kernel(%arg0: i32, %arg1: memref<5x8x128xf32, #tpu.memory_space<vmem>>, %arg2: memref<1x2x8x128xf32, #tpu.memory_space<vmem>>, %arg3: memref<6xf32, #tpu.memory_space<smem>>, %arg4: memref<8x128xf32, #tpu.memory_space<vmem>>) attributes {dimension_semantics = [#tpu.dimension_semantics<arbitrary>], iteration_bounds = array<i64: 5>, scalar_prefetch = 0 : i64, scratch_operands = 1 : i64, tpu.core_type = #tpu.core_type<tc>, window_params = [{pipeline_mode = #tpu.pipeline_mode<synchronous>, transform_indices = @transform_0, window_bounds = array<i64: 5, 8, 128>}, {transform_indices = @transform_1, window_bounds = array<i64: 1, 2, 8, 128>}, {transform_indices = @transform_2, window_bounds = array<i64: 6>}]} {
    %c0_i32 = arith.constant 0 : i32
    %0 = arith.cmpi eq, %arg0, %c0_i32 : i32
    %1 = arith.extui %0 : i1 to i32
    %c0_i32_0 = arith.constant 0 : i32
    %2 = arith.cmpi ne, %1, %c0_i32_0 : i32
    scf.if %2 {
      %cst_12 = arith.constant 0.000000e+00 : f32
      %19 = vector.broadcast %cst_12 : f32 to vector<8x128xf32>
      %c0_13 = arith.constant 0 : index
      %c0_14 = arith.constant 0 : index
      %20 = vector.load %arg4[%c0_13, %c0_14] : memref<8x128xf32, #tpu.memory_space<vmem>>, vector<8x128xf32>
      tpu.vector_store %arg4[%c0_13, %c0_14], %19 {strides = array<i32>} : memref<8x128xf32, #tpu.memory_space<vmem>>, vector<8x128xf32>,
    } else {
    }
    %c0 = arith.constant 0 : index
    %c0_1 = arith.constant 0 : index
    %c0_2 = arith.constant 0 : index
    %c0_3 = arith.constant 0 : index
    %3 = vector.load %arg2[%c0, %c0_1, %c0_2, %c0_3] : memref<1x2x8x128xf32, #tpu.memory_space<vmem>>, vector<1x1x8x128xf32>
    %4 = vector.shape_cast %3 : vector<1x1x8x128xf32> to vector<8x128xf32>
    %c0_4 = arith.constant 0 : index
    %c1 = arith.constant 1 : index
    %c0_5 = arith.constant 0 : index
    %c0_6 = arith.constant 0 : index
    %5 = vector.load %arg2[%c0_4, %c1, %c0_5, %c0_6] : memref<1x2x8x128xf32, #tpu.memory_space<vmem>>, vector<1x1x8x128xf32>
    %6 = vector.shape_cast %5 : vector<1x1x8x128xf32> to vector<8x128xf32>
    %c0_7 = arith.constant 0 : index
    %c0_8 = arith.constant 0 : index
    %7 = vector.load %arg4[%c0_7, %c0_8] : memref<8x128xf32, #tpu.memory_space<vmem>>, vector<8x128xf32>
    %8 = tpu.reciprocal %6 {approx = true} : vector<8x128xf32> -> vector<8x128xf32>
    %9 = arith.mulf %6, %8 : vector<8x128xf32>
    %cst = arith.constant 2.000000e+00 : f32
    %10 = vector.broadcast %cst : f32 to vector<8x128xf32>
    %11 = arith.subf %10, %9 : vector<8x128xf32>
    %12 = arith.mulf %8, %11 : vector<8x128xf32>
    %13 = arith.mulf %4, %12 : vector<8x128xf32>
    %14 = arith.addf %7, %13 : vector<8x128xf32>
    %c0_9 = arith.constant 0 : index
    %c0_10 = arith.constant 0 : index
    %15 = vector.load %arg4[%c0_9, %c0_10] : memref<8x128xf32, #tpu.memory_space<vmem>>, vector<8x128xf32>
    tpu.vector_store %arg4[%c0_9, %c0_10], %14 {strides = array<i32>} : memref<8x128xf32, #tpu.memory_space<vmem>>, vector<8x128xf32>,
    %c4_i32 = arith.constant 4 : i32
    %16 = arith.cmpi eq, %arg0, %c4_i32 : i32
    %17 = arith.extui %16 : i1 to i32
    %c0_i32_11 = arith.constant 0 : i32
    %18 = arith.cmpi ne, %17, %c0_i32_11 : i32
    scf.if %18 {
      %c0_12 = arith.constant 0 : index
      %c0_13 = arith.constant 0 : index
      %c0_14 = arith.constant 0 : index
      %19 = vector.load %arg1[%c0_12, %c0_13, %c0_14] : memref<5x8x128xf32, #tpu.memory_space<vmem>>, vector<1x8x128xf32>
      %20 = vector.shape_cast %19 : vector<1x8x128xf32> to vector<8x128xf32>
      %c1_15 = arith.constant 1 : index
      %c0_16 = arith.constant 0 : index
      %c0_17 = arith.constant 0 : index
      %21 = vector.load %arg1[%c1_15, %c0_16, %c0_17] : memref<5x8x128xf32, #tpu.memory_space<vmem>>, vector<1x8x128xf32>
      %22 = vector.shape_cast %21 : vector<1x8x128xf32> to vector<8x128xf32>
      %c2 = arith.constant 2 : index
      %c0_18 = arith.constant 0 : index
      %c0_19 = arith.constant 0 : index
      %23 = vector.load %arg1[%c2, %c0_18, %c0_19] : memref<5x8x128xf32, #tpu.memory_space<vmem>>, vector<1x8x128xf32>
      %24 = vector.shape_cast %23 : vector<1x8x128xf32> to vector<8x128xf32>
      %c3 = arith.constant 3 : index
      %c0_20 = arith.constant 0 : index
      %c0_21 = arith.constant 0 : index
      %25 = vector.load %arg1[%c3, %c0_20, %c0_21] : memref<5x8x128xf32, #tpu.memory_space<vmem>>, vector<1x8x128xf32>
      %26 = vector.shape_cast %25 : vector<1x8x128xf32> to vector<8x128xf32>
      %c4 = arith.constant 4 : index
      %c0_22 = arith.constant 0 : index
      %c0_23 = arith.constant 0 : index
      %27 = vector.load %arg1[%c4, %c0_22, %c0_23] : memref<5x8x128xf32, #tpu.memory_space<vmem>>, vector<1x8x128xf32>
      %28 = vector.shape_cast %27 : vector<1x8x128xf32> to vector<8x128xf32>
      %29 = tpu.reciprocal %20 {approx = true} : vector<8x128xf32> -> vector<8x128xf32>
      %30 = arith.mulf %20, %29 : vector<8x128xf32>
      %cst_24 = arith.constant 2.000000e+00 : f32
      %31 = vector.broadcast %cst_24 : f32 to vector<8x128xf32>
      %32 = arith.subf %31, %30 : vector<8x128xf32>
      %33 = arith.mulf %29, %32 : vector<8x128xf32>
      %cst_25 = arith.constant 3.158900e+00 : f32
      %34 = vector.broadcast %cst_25 : f32 to vector<8x128xf32>
      %35 = arith.mulf %34, %33 : vector<8x128xf32>
      %36 = arith.mulf %35, %35 : vector<8x128xf32>
      %37 = arith.mulf %36, %36 : vector<8x128xf32>
      %38 = arith.mulf %37, %36 : vector<8x128xf32>
      %39 = arith.mulf %38, %38 : vector<8x128xf32>
      %40 = arith.subf %39, %38 : vector<8x128xf32>
      %cst_26 = arith.constant 7.408000e-01 : f32
      %41 = vector.broadcast %cst_26 : f32 to vector<8x128xf32>
      %42 = arith.mulf %41, %40 : vector<8x128xf32>
      %cst_27 = arith.constant -0.0441125147 : f32
      %43 = vector.broadcast %cst_27 : f32 to vector<8x128xf32>
      %44 = arith.subf %42, %43 : vector<8x128xf32>
      %45 = vector.shape_cast %44 : vector<8x128xf32> to vector<1x8x128xf32>
      %cst_28 = arith.constant dense<0.000000e+00> : vector<1xf32>
      %46 = vector.multi_reduction <add>, %45, %cst_28 [1, 2] : vector<1x8x128xf32> to vector<1xf32>
      %47 = vector.shape_cast %46 : vector<1xf32> to vector<1x1x1xf32>
      %48 = vector.extract %47[0, 0, 0] : f32 from vector<1x1x1xf32>
      %cst_29 = arith.constant 9.419000e-01 : f32
      %49 = vector.broadcast %cst_29 : f32 to vector<8x128xf32>
      %50 = arith.subf %22, %49 : vector<8x128xf32>
      %cst_30 = arith.constant 2.287000e+00 : f32
      %51 = vector.broadcast %cst_30 : f32 to vector<8x128xf32>
      %52 = arith.mulf %50, %51 : vector<8x128xf32>
      %cst_31 = arith.constant 5.824820e+02 : f32
      %53 = vector.broadcast %cst_31 : f32 to vector<8x128xf32>
      %54 = arith.mulf %53, %50 : vector<8x128xf32>
      %55 = arith.mulf %54, %50 : vector<8x128xf32>
      %cst_32 = arith.constant 1.000000e+00 : f32
      %56 = vector.broadcast %cst_32 : f32 to vector<8x128xf32>
      %57 = arith.subf %56, %52 : vector<8x128xf32>
      %58 = arith.mulf %52, %52 : vector<8x128xf32>
      %cst_33 = arith.constant 0.583333313 : f32
      %59 = vector.broadcast %cst_33 : f32 to vector<8x128xf32>
      %60 = arith.mulf %58, %59 : vector<8x128xf32>
      %61 = arith.addf %57, %60 : vector<8x128xf32>
      %62 = arith.mulf %55, %61 : vector<8x128xf32>
      %63 = vector.shape_cast %62 : vector<8x128xf32> to vector<1x8x128xf32>
      %cst_34 = arith.constant dense<0.000000e+00> : vector<1xf32>
      %64 = vector.multi_reduction <add>, %63, %cst_34 [1, 2] : vector<1x8x128xf32> to vector<1xf32>
      %65 = vector.shape_cast %64 : vector<1xf32> to vector<1x1x1xf32>
      %66 = vector.extract %65[0, 0, 0] : f32 from vector<1x1x1xf32>
      %cst_35 = arith.constant 1.874480e+00 : f32
      %67 = vector.broadcast %cst_35 : f32 to vector<8x128xf32>
      %68 = arith.subf %24, %67 : vector<8x128xf32>
      %cst_36 = arith.constant 4.392500e+01 : f32
      %69 = vector.broadcast %cst_36 : f32 to vector<8x128xf32>
      %70 = arith.mulf %69, %68 : vector<8x128xf32>
      %71 = arith.mulf %70, %68 : vector<8x128xf32>
      %72 = vector.shape_cast %71 : vector<8x128xf32> to vector<1x8x128xf32>
      %cst_37 = arith.constant dense<0.000000e+00> : vector<1xf32>
      %73 = vector.multi_reduction <add>, %72, %cst_37 [1, 2] : vector<1x8x128xf32> to vector<1xf32>
      %74 = vector.shape_cast %73 : vector<1xf32> to vector<1x1x1xf32>
      %75 = vector.extract %74[0, 0, 0] : f32 from vector<1x1x1xf32>
      %76 = tpu.reciprocal %26 {approx = true} : vector<8x128xf32> -> vector<8x128xf32>
      %77 = arith.mulf %26, %76 : vector<8x128xf32>
      %cst_38 = arith.constant 2.000000e+00 : f32
      %78 = vector.broadcast %cst_38 : f32 to vector<8x128xf32>
      %79 = arith.subf %78, %77 : vector<8x128xf32>
      %80 = arith.mulf %76, %79 : vector<8x128xf32>
      %81 = vector.shape_cast %80 : vector<8x128xf32> to vector<1x8x128xf32>
      %cst_39 = arith.constant dense<0.000000e+00> : vector<1xf32>
      %82 = vector.multi_reduction <add>, %81, %cst_39 [1, 2] : vector<1x8x128xf32> to vector<1xf32>
      %83 = vector.shape_cast %82 : vector<1xf32> to vector<1x1x1xf32>
      %84 = vector.extract %83[0, 0, 0] : f32 from vector<1x1x1xf32>
      %85 = tpu.reciprocal %28 {approx = true} : vector<8x128xf32> -> vector<8x128xf32>
      %86 = arith.mulf %28, %85 : vector<8x128xf32>
      %cst_40 = arith.constant 2.000000e+00 : f32
      %87 = vector.broadcast %cst_40 : f32 to vector<8x128xf32>
      %88 = arith.subf %87, %86 : vector<8x128xf32>
      %89 = arith.mulf %85, %88 : vector<8x128xf32>
      %90 = vector.shape_cast %89 : vector<8x128xf32> to vector<1x8x128xf32>
      %cst_41 = arith.constant dense<0.000000e+00> : vector<1xf32>
      %91 = vector.multi_reduction <add>, %90, %cst_41 [1, 2] : vector<1x8x128xf32> to vector<1xf32>
      %92 = vector.shape_cast %91 : vector<1xf32> to vector<1x1x1xf32>
      %93 = vector.extract %92[0, 0, 0] : f32 from vector<1x1x1xf32>
      %cst_42 = arith.constant -1.112800e+00 : f32
      %94 = arith.mulf %84, %cst_42 : f32
      %cst_43 = arith.constant 5.564000e-01 : f32
      %95 = arith.mulf %93, %cst_43 : f32
      %96 = arith.addf %94, %95 : f32
      %cst_44 = arith.constant 184.760254 : f32
      %97 = arith.mulf %96, %cst_44 : f32
      %c0_45 = arith.constant 0 : index
      %c0_46 = arith.constant 0 : index
      %98 = vector.load %arg4[%c0_45, %c0_46] : memref<8x128xf32, #tpu.memory_space<vmem>>, vector<8x128xf32>
      %99 = vector.shape_cast %98 : vector<8x128xf32> to vector<1x8x128xf32>
      %cst_47 = arith.constant dense<0.000000e+00> : vector<1xf32>
      %100 = vector.multi_reduction <add>, %99, %cst_47 [1, 2] : vector<1x8x128xf32> to vector<1xf32>
      %101 = vector.shape_cast %100 : vector<1xf32> to vector<1x1x1xf32>
      %102 = vector.extract %101[0, 0, 0] : f32 from vector<1x1x1xf32>
      %cst_48 = arith.constant 332.063721 : f32
      %103 = arith.mulf %cst_48, %102 : f32
      %c0_49 = arith.constant 0 : index
      %104 = memref.load %arg3[%c0_49] : memref<6xf32, #tpu.memory_space<smem>>
      memref.store %48, %arg3[%c0_49] : memref<6xf32, #tpu.memory_space<smem>>
      %c1_50 = arith.constant 1 : index
      %105 = memref.load %arg3[%c1_50] : memref<6xf32, #tpu.memory_space<smem>>
      memref.store %66, %arg3[%c1_50] : memref<6xf32, #tpu.memory_space<smem>>
      %c2_51 = arith.constant 2 : index
      %106 = memref.load %arg3[%c2_51] : memref<6xf32, #tpu.memory_space<smem>>
      memref.store %75, %arg3[%c2_51] : memref<6xf32, #tpu.memory_space<smem>>
      %c3_52 = arith.constant 3 : index
      %107 = memref.load %arg3[%c3_52] : memref<6xf32, #tpu.memory_space<smem>>
      memref.store %103, %arg3[%c3_52] : memref<6xf32, #tpu.memory_space<smem>>
      %c4_53 = arith.constant 4 : index
      %108 = memref.load %arg3[%c4_53] : memref<6xf32, #tpu.memory_space<smem>>
      memref.store %97, %arg3[%c4_53] : memref<6xf32, #tpu.memory_space<smem>>
      %109 = arith.addf %66, %75 : f32
      %110 = arith.addf %109, %48 : f32
      %111 = arith.addf %110, %103 : f32
      %112 = arith.subf %111, %97 : f32
      %c5 = arith.constant 5 : index
      %113 = memref.load %arg3[%c5] : memref<6xf32, #tpu.memory_space<smem>>
      memref.store %112, %arg3[%c5] : memref<6xf32, #tpu.memory_space<smem>>
    } else {
    }
    return
  }
  func.func @transform_0(%arg0: i32) -> (i32, i32, i32) {
    %c0_i32 = arith.constant 0 : i32
    %c0_i32_0 = arith.constant 0 : i32
    %c0_i32_1 = arith.constant 0 : i32
    %c0_i32_2 = arith.constant 0 : i32
    return %c0_i32, %c0_i32_0, %c0_i32_1 : i32, i32, i32
  }
  func.func @transform_1(%arg0: i32) -> (i32, i32, i32, i32) {
    %c0_i32 = arith.constant 0 : i32
    %c0_i32_0 = arith.constant 0 : i32
    %c0_i32_1 = arith.constant 0 : i32
    %c0_i32_2 = arith.constant 0 : i32
    return %arg0, %c0_i32, %c0_i32_0, %c0_i32_1 : i32, i32, i32, i32
  }
  func.func @transform_2(%arg0: i32) -> i32 {
    %c0_i32 = arith.constant 0 : i32
    %c0_i32_0 = arith.constant 0 : i32
    return %c0_i32 : i32
  }
}

</mosaic_0001>

<llo_original>
// kernel: water_energy_terms.1
$region0: #{water_energy_terms.1}
  #allocation0 [shape = 'u32[]', space=smem, size = 0x4, offset = 0x4, fixed_abs, tag = 'smem constant byte address 0x4 - core index']
  #allocation1 [shape = 'u32[144,128]{1,0:T(1,128)}', space=vmem, size = 0x12000, scoped, tag = 'internal scratch']
  #allocation2 [shape = 'f32[8,128]{1,0:T(8,128)}', space=vmem, size = 0x1000, scoped, tag = 'scratch operand']
  %s0 = inlined_call_operand.hbm [shape: f32[5,8,128], index: 0, kind: input, shape index: {}]
  %s1 = inlined_call_operand.hbm [shape: f32[5,2,8,128], index: 1, kind: input, shape index: {}]
  %s2 = inlined_call_operand.hbm [shape: f32[6], index: 2, kind: output, shape index: {}]
  %s3 = sld [smem:[#allocation0]]
  $region57: #{water_energy_terms.1} parent=0
    _
  %s5 = ssub.s32 1, %s3
  %s6 = scalar_select 0, %s5, %s3
  $region1: #{water_energy_terms.1} parent=0
    #allocation3 [shape = 'u8[20480]{0}', space=vmem, size = 0x5000, scoped, tag = 'input window, operand 0, single buffered']
    #allocation4 [shape = 's32[2]{0}', space=sflag, size = 0x8, scoped, tag = 'scoped memory for water_energy_terms.1']
    #allocation5 [shape = 's32[2]{0}', space=sflag, size = 0x8, scoped, tag = 'scoped memory for water_energy_terms.1']
    #allocation6 [shape = 'u8[16384]{0}', space=vmem, size = 0x4000, scoped, tag = 'input window, operand 1']
    #allocation7 [shape = 's32[2]{0}', space=sflag, size = 0x8, scoped, tag = 'scoped memory for water_energy_terms.1']
    #allocation8 [shape = 'u8[512]{0}', space=smem, size = 0x200, scoped, tag = 'output window, operand 0, single buffered']
    %7 = vsyncpa [#allocation4], 0
    %8 = vsyncpa [#allocation7], 0
    %s9 = scalar_lea.sflag [#allocation7], 1
    %10 = vsyncpa %s9, 0
    %11 = vsyncpa [#allocation5], 0
    loop: start=0, step=1, limit=7
    $region2: #{water_energy_terms.1} parent=1 // loop_pre_header
      _
    $region3: #{water_energy_terms.1} parent=1 // loop_header
      %s13 = sphi 0, %s17
      %p14 = scmp.ge.s32.totalorder %s13, 7
      %s21 = sphi 0, %s21
      %s23 = sphi 0, %s21
      %s24 = sphi 0, %s23
      %s38 = sphi 0, %s24
      %s44 = sphi 0, %s46
      %s47 = sphi 0, %s44
      %s48 = sphi 0, %s47
      %s64 = sphi 0, %s48
      %s68 = sphi 0, %s68
      %s70 = sphi 0, %s68
      %s71 = sphi 0, %s70
      %s85 = sphi 0, %s71
    $region4: #{water_energy_terms.1} parent=1 // loop_header_branch
      %16 = sbr.rel (%p14) target = $region8
    $region5: #{water_energy_terms.1} parent=1 // loop_body
      %s18 = ssub.s32 %s13, 1
      %s19 = ssub.s32 %s13, 2
      %s20 = sadd.s32 %s13, 1
      %s22 = sadd.s32 %s21, 1
      %p25 = scmp.eq.s32.totalorder %s13, 4
      %p26 = scmp.ne.s32.totalorder %s21, %s23
      %p27 = scmp.eq.s32.totalorder %s13, 0
      %p28 = por %p26, %p27
      %p29 = scmp.ne.s32.totalorder %s21, %s23
      %p30 = scmp.eq.s32.totalorder %s18, 4
      %p31 = por %p29, %p30
      %p32 = scmp.ne.s32.totalorder %s23, %s24
      %p33 = scmp.eq.s32.totalorder %s18, 0
      %p34 = por %p32, %p33
      %p35 = scmp.ne.s32.totalorder %s23, %s24
      %p36 = scmp.eq.s32.totalorder %s19, 4
      %p37 = por %p35, %p36
      %p39 = scmp.ne.s32.totalorder %s24, %s38
      %p40 = scmp.eq.s32.totalorder %s19, 0
      %p41 = por %p39, %p40
      %s42 = ssub.s32 %s13, %s20
      %p43 = scmp.eq.s32.totalorder %s42, 0
      %s45 = sadd.s32 %s44, 1
      %s46 = scalar_select %p43, %s44, %s45
      %p49 = pneg %p43
      %p50 = scmp.eq.s32.totalorder %s13, 4
      %p51 = por %p49, %p50
      %p52 = scmp.ne.s32.totalorder %s44, %s47
      %p53 = scmp.eq.s32.totalorder %s13, 0
      %p54 = por %p52, %p53
      %p55 = scmp.ne.s32.totalorder %s44, %s47
      %p56 = scmp.eq.s32.totalorder %s18, 4
      %p57 = por %p55, %p56
      %p58 = scmp.ne.s32.totalorder %s47, %s48
      %p59 = scmp.eq.s32.totalorder %s18, 0
      %p60 = por %p58, %p59
      %p61 = scmp.ne.s32.totalorder %s47, %s48
      %p62 = scmp.eq.s32.totalorder %s19, 4
      %p63 = por %p61, %p62
      %p65 = scmp.ne.s32.totalorder %s48, %s64
      %p66 = scmp.eq.s32.totalorder %s19, 0
      %p67 = por %p65, %p66
      %s69 = sadd.s32 %s68, 1
      %p72 = scmp.eq.s32.totalorder %s13, 4
      %p73 = scmp.ne.s32.totalorder %s68, %s70
      %p74 = scmp.eq.s32.totalorder %s13, 0
      %p75 = por %p73, %p74
      %p76 = scmp.ne.s32.totalorder %s68, %s70
      %p77 = scmp.eq.s32.totalorder %s18, 4
      %p78 = por %p76, %p77
      %p79 = scmp.ne.s32.totalorder %s70, %s71
      %p80 = scmp.eq.s32.totalorder %s18, 0
      %p81 = por %p79, %p80
      %p82 = scmp.ne.s32.totalorder %s70, %s71
      %p83 = scmp.eq.s32.totalorder %s19, 4
      %p84 = por %p82, %p83
      %p86 = scmp.ne.s32.totalorder %s71, %s85
      %p87 = scmp.eq.s32.totalorder %s19, 0
      %p88 = por %p86, %p87
      %p89 = scmp.le.s32.totalorder 1, %s13
      %p90 = scmp.lt.s32.totalorder %s13, 6
      %p91 = pnand %p89, %p90
      %p92 = pneg %p91
      // Predicated region
      $region9: #{water_energy_terms.1} parent=5 // pred_check
        _
      $region10: #{water_energy_terms.1} parent=5 // pred_check_branch
        %94 = sbr.rel (%p91) target = $region12
      $region11: #{water_energy_terms.1} parent=5 // pred_region
        %s95 = ssub.s32 %s13, 1
        // Predicated region
        $region13: #{water_energy_terms.1} parent=11 // pred_check
          %p96 = pneg %p34
        $region14: #{water_energy_terms.1} parent=11 // pred_check_branch
          %98 = sbr.rel (%p96) target = $region16
        $region15: #{water_energy_terms.1} parent=11 // pred_region
          %s100 = ssub.s32 640, 640
          %101 = vsyncadd [#allocation4], %s100
          %s102 = sshll.u32 [#allocation3], 4
          %s103 = int_to_ptr.vmem [resolvable:$true] %s102
          %108 = dma.hbm_to_vmem [thread:$0]  %s0, 640, %s103, [#allocation4], 128, 128, 8
        $region16: #{water_energy_terms.1} parent=11 // pred_fallthru
          _
      $region12: #{water_energy_terms.1} parent=5 // pred_fallthru
        _
      %p109 = scmp.lt.s32.totalorder %s13, 5
      // Predicated region
      $region17: #{water_energy_terms.1} parent=5 // pred_check
        %p110 = pneg %p109
      $region18: #{water_energy_terms.1} parent=5 // pred_check_branch
        %112 = sbr.rel (%p110) target = $region20
      $region19: #{water_energy_terms.1} parent=5 // pred_region
        // Predicated region
        $region21: #{water_energy_terms.1} parent=19 // pred_check
          %p113 = pneg %p54
        $region22: #{water_energy_terms.1} parent=19 // pred_check_branch
          %115 = sbr.rel (%p113) target = $region24
        $region23: #{water_energy_terms.1} parent=19 // pred_region
          %s116 = sand.u32 %s44, 1
          %s117 = scalar_lea.sflag [#allocation7], %s116
          %s118 = sand.u32 %s44, 1
          %s119 = smul.addr %s118, 16
          %s120 = scalar_lea.vmem [#allocation6], %s119
          %s122 = ssub.s32 256, 256
          %123 = vsyncadd %s117, %s122
          %s124 = smul.addr %s13, 2
          %s125 = smul.addr %s124, 128
          %s126 = scalar_lea.hbm %s1, %s125
          %s127 = sshll.u32 %s120, 4
          %s128 = int_to_ptr.vmem [resolvable:$true] %s127
          %133 = dma.hbm_to_vmem [thread:$0]  %s126, 256, %s128, %s117, 128, 128, 8
        $region24: #{water_energy_terms.1} parent=19 // pred_fallthru
          _
      $region20: #{water_energy_terms.1} parent=5 // pred_fallthru
        _
      %p134 = scmp.le.s32.totalorder 1, %s13
      %p135 = scmp.lt.s32.totalorder %s13, 6
      %p136 = pnand %p134, %p135
      %p137 = pneg %p136
      // Predicated region
      $region25: #{water_energy_terms.1} parent=5 // pred_check
        _
      $region26: #{water_energy_terms.1} parent=5 // pred_check_branch
        %139 = sbr.rel (%p136) target = $region28
      $region27: #{water_energy_terms.1} parent=5 // pred_region
        %s140 = ssub.s32 %s13, 1
        // Predicated region
        $region29: #{water_energy_terms.1} parent=27 // pred_check
          %p141 = pneg %p34
        $region30: #{water_energy_terms.1} parent=27 // pred_check_branch
          %143 = sbr.rel (%p141) target = $region32
        $region31: #{water_energy_terms.1} parent=27 // pred_region
          %144 = dma.done [#allocation4], 640
        $region32: #{water_energy_terms.1} parent=27 // pred_fallthru
          _
        %s145 = sand.u32 %s47, 1
        %s146 = scalar_lea.sflag [#allocation7], %s145
        %s147 = sand.u32 %s47, 1
        %s148 = smul.addr %s147, 16
        %s149 = scalar_lea.vmem [#allocation6], %s148
        // Predicated region
        $region33: #{water_energy_terms.1} parent=27 // pred_check
          %p150 = pneg %p60
        $region34: #{water_energy_terms.1} parent=27 // pred_check_branch
          %152 = sbr.rel (%p150) target = $region36
        $region35: #{water_energy_terms.1} parent=27 // pred_region
          %153 = dma.done %s146, 256
        $region36: #{water_energy_terms.1} parent=27 // pred_fallthru
          _
        %p154 = pneg %p34
        %p155 = pneg %p31
        %s156 = sand.u32 %s47, 1
        %s157 = scalar_lea.sflag [#allocation7], %s156
        %s158 = sand.u32 %s47, 1
        %s159 = smul.addr %s158, 16
        %s160 = scalar_lea.vmem [#allocation6], %s159
        %p161 = pneg %p60
        %p162 = pneg %p57
        %p163 = pneg %p81
        %p164 = pneg %p78
        %p165 = scmp.eq.s32.totalorder %s18, 0
        // Predicated region
        $region37: #{water_energy_terms.1} parent=27 // pred_check
          %p166 = pneg %p165
        $region38: #{water_energy_terms.1} parent=27 // pred_check_branch
          %168 = sbr.rel (%p166) target = $region40
        $region39: #{water_energy_terms.1} parent=27 // pred_region
          %169 = vst [vmem:[#allocation2] sm:$0xff] 0.0
        $region40: #{water_energy_terms.1} parent=27 // pred_fallthru
          _
        %v170 = vld [vmem:[%s149] sm:$0xff]
        %s171 = scalar_lea.vmem %s149, 8 [#allocation6]
        %v172 = vld [vmem:[%s171] sm:$0xff]
        %v173 = vld [vmem:[#allocation2] sm:$0xff]
        %v174 = vrcp.pop %v172
        %v175 = vmul.f32 %v172, %v174
        %v176 = vsub.f32 2.0, %v175
        %v177 = vmul.f32 %v174, %v176
        %v178 = vmul.f32 %v170, %v177
        %v179 = vadd.f32 %v173, %v178
        %180 = vst [vmem:[#allocation2] sm:$0xff] %v179
        %p181 = scmp.eq.s32.totalorder %s18, 4
        // Predicated region
        $region41: #{water_energy_terms.1} parent=27 // pred_check
          %p182 = pneg %p181
        $region42: #{water_energy_terms.1} parent=27 // pred_check_branch
          %184 = sbr.rel (%p182) target = $region44
        $region43: #{water_energy_terms.1} parent=27 // pred_region
          %v185 = vld [vmem:[#allocation3] sm:$0xff]
          %s186 = scalar_lea.vmem [#allocation3], 8
          %v187 = vld [vmem:[%s186] sm:$0xff]
          %s188 = scalar_lea.vmem [#allocation3], 16
          %v189 = vld [vmem:[%s188] sm:$0xff]
          %s190 = scalar_lea.vmem [#allocation3], 24
          %v191 = vld [vmem:[%s190] sm:$0xff]
          %s192 = scalar_lea.vmem [#allocation3], 32
          %v193 = vld [vmem:[%s192] sm:$0xff]
          %v194 = vrcp.pop %v185
          %v195 = vmul.f32 %v185, %v194
          %v196 = vsub.f32 2.0, %v195
          %v197 = vmul.f32 %v194, %v196
          %v198 = vmul.f32 %v197, 3.1589
          %v199 = vmul.f32 %v198, %v198
          %v200 = vmul.f32 %v199, %v199
          %v201 = vmul.f32 %v200, %v199
          %v202 = vmul.f32 %v201, %v201
          %v203 = vsub.f32 %v202, %v201
          %v204 = vmul.f32 %v203, 0.7408
          %v205 = vsub.f32 %v204, -0.044112515
          %206 = vadd.xlane.f32.xlu0 %v205
          %v207 = vpop.xlane.xlu0 %206
          %v208 = vrot.slane %v207, 4
          %v209 = vadd.f32 %v207, %v208
          %v210 = vrot.slane %v209, 2
          %v211 = vadd.f32 %v209, %v210
          %v212 = vrot.slane %v211, 1
          %v213 = vadd.f32 %v211, %v212
          %s214 = vtos %v213
          %v215 = vsub.f32 %v187, 0.9419
          %v216 = vmul.f32 %v215, 2.287
          %v217 = vmul.f32 %v215, 582.482
          %v218 = vmul.f32 %v217, %v215
          %v219 = vsub.f32 1.0, %v216
          %v220 = vmul.f32 %v216, %v216
          %v221 = vmul.f32 %v220, 0.5833333
          %v222 = vadd.f32 %v219, %v221
          %v223 = vmul.f32 %v218, %v222
          %224 = vadd.xlane.f32.xlu0 %v223
          %v225 = vpop.xlane.xlu0 %224
          %v226 = vrot.slane %v225, 4
          %v227 = vadd.f32 %v225, %v226
          %v228 = vrot.slane %v227, 2
          %v229 = vadd.f32 %v227, %v228
          %v230 = vrot.slane %v229, 1
          %v231 = vadd.f32 %v229, %v230
          %s232 = vtos %v231
          %v233 = vsub.f32 %v189, 1.87448
          %v234 = vmul.f32 %v233, 43.925
          %v235 = vmul.f32 %v234, %v233
          %236 = vadd.xlane.f32.xlu0 %v235
          %v237 = vpop.xlane.xlu0 %236
          %v238 = vrot.slane %v237, 4
          %v239 = vadd.f32 %v237, %v238
          %v240 = vrot.slane %v239, 2
          %v241 = vadd.f32 %v239, %v240
          %v242 = vrot.slane %v241, 1
          %v243 = vadd.f32 %v241, %v242
          %s244 = vtos %v243
          %v245 = vrcp.pop %v191
          %v246 = vmul.f32 %v191, %v245
          %v247 = vsub.f32 2.0, %v246
          %v248 = vmul.f32 %v245, %v247
          %249 = vadd.xlane.f32.xlu0 %v248
          %v250 = vpop.xlane.xlu0 %249
          %v251 = vrot.slane %v250, 4
          %v252 = vadd.f32 %v250, %v251
          %v253 = vrot.slane %v252, 2
          %v254 = vadd.f32 %v252, %v253
          %v255 = vrot.slane %v254, 1
          %v256 = vadd.f32 %v254, %v255
          %s257 = vtos %v256
          %v258 = vrcp.pop %v193
          %v259 = vmul.f32 %v193, %v258
          %v260 = vsub.f32 2.0, %v259
          %v261 = vmul.f32 %v258, %v260
          %262 = vadd.xlane.f32.xlu0 %v261
          %v263 = vpop.xlane.xlu0 %262
          %v264 = vrot.slane %v263, 4
          %v265 = vadd.f32 %v263, %v264
          %v266 = vrot.slane %v265, 2
          %v267 = vadd.f32 %v265, %v266
          %v268 = vrot.slane %v267, 1
          %v269 = vadd.f32 %v267, %v268
          %s270 = vtos %v269
          %s271 = smul.f32 %s257, -1.1128
          %s272 = smul.f32 %s270, 0.5564
          %s273 = sadd.f32 %s271, %s272
          %s274 = smul.f32 %s273, 184.76025
          %v275 = vld [vmem:[#allocation2] sm:$0xff]
          %276 = vadd.xlane.f32.xlu0 %v275
          %v277 = vpop.xlane.xlu0 %276
          %v278 = vrot.slane %v277, 4
          %v279 = vadd.f32 %v277, %v278
          %v280 = vrot.slane %v279, 2
          %v281 = vadd.f32 %v279, %v280
          %v282 = vrot.slane %v281, 1
          %v283 = vadd.f32 %v281, %v282
          %s284 = vtos %v283
          %s285 = smul.f32 %s284, 332.06372
          %s286 = scalar_lea.smem [#allocation8], 0
          %287 = sst [smem:[%s286]] %s214
          %s288 = scalar_lea.smem [#allocation8], 1
          %289 = sst [smem:[%s288]] %s232
          %s290 = scalar_lea.smem [#allocation8], 2
          %291 = sst [smem:[%s290]] %s244
          %s292 = scalar_lea.smem [#allocation8], 3
          %293 = sst [smem:[%s292]] %s285
          %s294 = scalar_lea.smem [#allocation8], 4
          %295 = sst [smem:[%s294]] %s274
          %s296 = sadd.f32 %s232, %s244
          %s297 = sadd.f32 %s296, %s214
          %s298 = sadd.f32 %s297, %s285
          %s299 = ssub.f32 %s298, %s274
          %s300 = scalar_lea.smem [#allocation8], 5
          %301 = sst [smem:[%s300]] %s299
        $region44: #{water_energy_terms.1} parent=27 // pred_fallthru
          _
        // Predicated region
        $region45: #{water_energy_terms.1} parent=27 // pred_check
          %p302 = pneg %p78
        $region46: #{water_energy_terms.1} parent=27 // pred_check_branch
          %304 = sbr.rel (%p302) target = $region48
        $region47: #{water_energy_terms.1} parent=27 // pred_region
          %s306 = ssub.s32 16, 16
          %307 = vsyncadd [#allocation5], %s306
          %310 = dma.smem_to_hbm [#allocation8], 16, %s2, [#allocation5]
        $region48: #{water_energy_terms.1} parent=27 // pred_fallthru
          _
        // Predicated region
        $region49: #{water_energy_terms.1} parent=27 // pred_check
          %p311 = pneg %p78
        $region50: #{water_energy_terms.1} parent=27 // pred_check_branch
          %313 = sbr.rel (%p311) target = $region52
        $region51: #{water_energy_terms.1} parent=27 // pred_region
          %314 = dma.done [#allocation5], 16
        $region52: #{water_energy_terms.1} parent=27 // pred_fallthru
          _
        %315 = sfence
      $region28: #{water_energy_terms.1} parent=5 // pred_fallthru
        _
      %p316 = scmp.le.s32.totalorder 2, %s13
      // Predicated region
      $region53: #{water_energy_terms.1} parent=5 // pred_check
        %p317 = pneg %p316
      $region54: #{water_energy_terms.1} parent=5 // pred_check_branch
        %319 = sbr.rel (%p317) target = $region56
      $region55: #{water_energy_terms.1} parent=5 // pred_region
        %s320 = ssub.s32 %s13, 2
      $region56: #{water_energy_terms.1} parent=5 // pred_fallthru
        _
    $region6: #{water_energy_terms.1} parent=1 // loop_footer
      %s17 = sadd.s32 1, %s13
    $region7: #{water_energy_terms.1} parent=1 // loop_footer_branch
      %12 = sbr.rel target = $region3
    $region8: #{water_energy_terms.1} parent=1 // loop_exit
      _
    %321 = vsyncpa [#allocation4], 1
    %s322 = scalar_lea.sflag [#allocation4], 1
    %323 = vsyncpa %s322, 1
    %324 = vsyncpa [#allocation7], 1
    %s325 = scalar_lea.sflag [#allocation7], 1
    %326 = vsyncpa %s325, 1
    %327 = vsyncpa [#allocation5], 1
    %s328 = scalar_lea.sflag [#allocation5], 1
    %329 = vsyncpa %s328, 1

</llo_original>
